<compile_context>
chip_gen: v5e
topology: v5e:2x2
jax: 0.10.0
libtpu: 0.0.40
codegen_flags: <defaults>
</compile_context>

<pallas_src>
import math

import numpy as np
import jax
import jax.numpy as jnp
from jax.experimental import pallas as pl
from jax.experimental.pallas import tpu as pltpu

C1 = 64   # conv1 out_channels
C2 = 32   # conv2 out_channels


def _round8(v):
    return (v + 7) // 8 * 8


def _param_layout(in_channels, edge_dim):
    """Row offsets of each parameter block inside the packed [rows, 4*C1] slab.

    Every block starts on an 8-row (sublane-tile) boundary so all in-kernel ref
    slices are aligned loads.
    """
    o_w1 = 0                                   # [in_channels, 4*C1]  q|k|v|skip
    o_w2 = _round8(in_channels)                # [C1, 4*C2]           q|k|v|skip
    o_we1 = o_w2 + C1                          # [edge_dim, C1]
    o_we2 = o_we1 + _round8(edge_dim)          # [edge_dim, C2]
    o_b1 = o_we2 + _round8(edge_dim)           # [1, 4*C1]
    o_b2 = o_b1 + 8                            # [1, 4*C2]
    o_wc = o_b2 + 8                            # [1, C2]   classifier weight (row)
    o_bc = o_wc + 8                            # [1, 1]    classifier bias
    rows = o_bc + 8
    return {"w1": o_w1, "w2": o_w2, "we1": o_we1, "we2": o_we2,
            "b1": o_b1, "b2": o_b2, "wc": o_wc, "bc": o_bc,
            "rows": rows, "lanes": 4 * C1}


_PARAM_ORDER = (
    "wq1", "bq1", "wk1", "bk1", "wv1", "bv1", "we1", "ws1", "bs1",
    "wq2", "bq2", "wk2", "bk2", "wv2", "bv2", "we2", "ws2", "bs2",
    "wc", "bc",
)


def init_params(key, in_channels, edge_dim):
    """Deterministic synthetic weights matching TransformerConv/Linear shapes."""
    dims = {
        # layer 1: in_channels -> 64
        "wq1": (in_channels, C1), "bq1": (1, C1),
        "wk1": (in_channels, C1), "bk1": (1, C1),
        "wv1": (in_channels, C1), "bv1": (1, C1),
        "we1": (edge_dim, C1),                       # lin_edge has no bias
        "ws1": (in_channels, C1), "bs1": (1, C1),    # root/skip linear
        # layer 2: 64 -> 32
        "wq2": (C1, C2), "bq2": (1, C2),
        "wk2": (C1, C2), "bk2": (1, C2),
        "wv2": (C1, C2), "bv2": (1, C2),
        "we2": (edge_dim, C2),
        "ws2": (C1, C2), "bs2": (1, C2),
        # classifier: 32 -> 1
        "wc": (C2, 1), "bc": (1, 1),
    }
    params = {}
    for name in _PARAM_ORDER:
        key, sub = jax.random.split(key)
        params[name] = (0.1 * jax.random.normal(sub, dims[name])).astype(jnp.float32)
    return params


def pack_params(params, in_channels, edge_dim):
    """Pack the 20 small tensors into one f32 VMEM slab (1 DMA operand, not 20)."""
    L = _param_layout(in_channels, edge_dim)
    w1 = jnp.concatenate([params["wq1"], params["wk1"],
                          params["wv1"], params["ws1"]], axis=1)   # [F, 4*C1]
    b1 = jnp.concatenate([params["bq1"], params["bk1"],
                          params["bv1"], params["bs1"]], axis=1)   # [1, 4*C1]
    w2 = jnp.concatenate([params["wq2"], params["wk2"],
                          params["wv2"], params["ws2"]], axis=1)   # [C1, 4*C2]
    b2 = jnp.concatenate([params["bq2"], params["bk2"],
                          params["bv2"], params["bs2"]], axis=1)   # [1, 4*C2]
    p = jnp.zeros((L["rows"], L["lanes"]), jnp.float32)
    p = p.at[L["w1"]:L["w1"] + in_channels, 0:4 * C1].set(w1)
    p = p.at[L["w2"]:L["w2"] + C1, 0:4 * C2].set(w2)
    p = p.at[L["we1"]:L["we1"] + edge_dim, 0:C1].set(params["we1"])
    p = p.at[L["we2"]:L["we2"] + edge_dim, 0:C2].set(params["we2"])
    p = p.at[L["b1"], 0:4 * C1].set(b1[0])
    p = p.at[L["b2"], 0:4 * C2].set(b2[0])
    p = p.at[L["wc"], 0:C2].set(params["wc"][:, 0])
    p = p.at[L["bc"], 0].set(params["bc"][0, 0])
    return p


def build_dense_graph(edge_index, edge_attr, num_nodes):
    """One-time densification of the static graph (hoisted out of the hot path).

    mask[i, j] = 1 iff there is an edge j -> i.
    ef[d, i, j] = d-th edge feature of edge j -> i (channel-major so the kernel
    takes cheap leading-axis slices; zeros where there is no edge).
    """
    ei = np.asarray(edge_index)
    # Duplicate edges would be silently collapsed by the dense representation.
    assert len(set(zip(ei[0].tolist(), ei[1].tolist()))) == ei.shape[1], \
        "duplicate edges are not supported by the dense-adjacency kernel"
    src = edge_index[0]
    dst = edge_index[1]
    de = edge_attr.shape[-1]
    mask = jnp.zeros((num_nodes, num_nodes), jnp.float32).at[dst, src].set(1.0)
    ef = jnp.zeros((de, num_nodes, num_nodes), jnp.float32)
    ef = ef.at[:, dst, src].set(edge_attr.astype(jnp.float32).T)
    return mask, ef


def _make_gnn_kernel(in_channels, edge_dim, layout):
    L = layout
    inv_sqrt = {C1: 1.0 / math.sqrt(C1), C2: 1.0 / math.sqrt(C2)}

    def conv(x, mask, neg_bias, ef, w, b, we, c):
        # Fused q/k/v/skip projection: ONE MXU call on the packed [F, 4c] weight.
        qkvs = jnp.dot(x, w, preferred_element_type=jnp.float32) + b   # [n, 4c]
        q = qkvs[:, 0:c]
        k = qkvs[:, c:2 * c]
        v = qkvs[:, 2 * c:3 * c]
        skip = qkvs[:, 3 * c:4 * c]

        # scores_ij = q_i . (k_j + e_ij) / sqrt(c),  e_ij = ef[:, i, j] @ we.
        # The q.e term is factored as sum_d (q . we[d]) * ef[d]; the [n, n, c]
        # edge-projection tensor is never materialized (unrolled VPU MACs).
        scores = jnp.dot(q, k.T, preferred_element_type=jnp.float32)     # [n, n]
        for d in range(edge_dim):
            qwe_d = jnp.sum(q * we[d:d + 1, :], axis=-1, keepdims=True)  # [n, 1]
            scores = scores + qwe_d * ef[d]
        scores = scores * inv_sqrt[c] + neg_bias

        # Masked softmax over source nodes j (incoming edges per destination i).
        m = jnp.max(scores, axis=-1, keepdims=True)
        p = jnp.exp(scores - m) * mask   # mask keeps isolated-node rows at zero
        denom = jnp.sum(p, axis=-1, keepdims=True)
        alpha = p / (denom + 1e-16)      # matches torch_geometric.utils.softmax eps

        # out_i = sum_j alpha_ij (v_j + e_ij) + skip_i. Edge term factored as
        # (sum_j alpha_ij ef[:, i, j]) @ we, unrolled over edge_dim on the VPU.
        out = jnp.dot(alpha, v, preferred_element_type=jnp.float32)      # [n, c]
        for d in range(edge_dim):
            ae_d = jnp.sum(alpha * ef[d], axis=-1, keepdims=True)        # [n, 1]
            out = out + ae_d * we[d:d + 1, :]
        return out + skip

    def kernel(x_ref, mask_ref, ef_ref, p_ref, out_ref):
        x = x_ref[...]
        mask = mask_ref[...]
        ef = ef_ref[...]
        neg_bias = (mask - 1.0) * 1e30   # additive mask bias, shared by both layers

        # Static slices carve the packed parameter slab (no extra DMAs).
        w1 = p_ref[L["w1"]:L["w1"] + in_channels, 0:4 * C1]
        b1 = p_ref[L["b1"]:L["b1"] + 1, 0:4 * C1]
        we1 = p_ref[L["we1"]:L["we1"] + edge_dim, 0:C1]
        w2 = p_ref[L["w2"]:L["w2"] + C1, 0:4 * C2]
        b2 = p_ref[L["b2"]:L["b2"] + 1, 0:4 * C2]
        we2 = p_ref[L["we2"]:L["we2"] + edge_dim, 0:C2]
        wc = p_ref[L["wc"]:L["wc"] + 1, 0:C2]
        bc = p_ref[L["bc"]:L["bc"] + 1, 0:1]

        h = conv(x, mask, neg_bias, ef, w1, b1, we1, C1)
        h = jnp.maximum(h, 0.0)
        h = conv(h, mask, neg_bias, ef, w2, b2, we2, C2)
        h = jnp.maximum(h, 0.0)

        # Classifier, emitted lane-dense as [1, n] (nodes on the lane axis).
        logits = jnp.dot(wc, h.T, preferred_element_type=jnp.float32) + bc
        out_ref[...] = jax.nn.sigmoid(logits)

    return kernel


def stock_predict_gnn(x, mask, ef, packed_params, in_channels, edge_dim):
    """Fused forward pass; mask/ef/packed_params are precomputed once per graph."""
    n = x.shape[0]
    layout = _param_layout(in_channels, edge_dim)
    kernel = _make_gnn_kernel(in_channels, edge_dim, layout)
    # TODO(synk): add a leading "parallel" batch grid axis (many sectors / time
    # steps per call) to engage both v7x TensorCores and amortize per-call
    # overhead; kept gridless here since the PyTorch module is single-graph.
    out = pl.pallas_call(
        kernel,
        out_shape=jax.ShapeDtypeStruct((1, n), jnp.float32),
        in_specs=[pl.BlockSpec(memory_space=pltpu.MemorySpace.VMEM)] * 4,
        out_specs=pl.BlockSpec(memory_space=pltpu.MemorySpace.VMEM),
    )(x.astype(jnp.float32), mask, ef, packed_params)
    # matches torch.sigmoid(classifier(x)).squeeze(-1)
    return out[0]


if __name__ == "__main__":
    IN_CHANNELS = 16   # per-node input features
    EDGE_DIM = 4       # edge attribute dimension
    N_NODES = 8        # stocks in the sector

    key = jax.random.PRNGKey(0)
    k_x, k_e, k_p = jax.random.split(key, 3)

    x = jax.random.normal(k_x, (N_NODES, IN_CHANNELS), dtype=jnp.float32)

    # Deterministic simple graph: bidirectional ring (no duplicate edges).
    src = jnp.concatenate([jnp.arange(N_NODES), (jnp.arange(N_NODES) + 1) % N_NODES])
    dst = jnp.concatenate([(jnp.arange(N_NODES) + 1) % N_NODES, jnp.arange(N_NODES)])
    edge_index = jnp.stack([src, dst]).astype(jnp.int32)          # [2, 16]
    edge_attr = jax.random.normal(k_e, (edge_index.shape[1], EDGE_DIM),
                                  dtype=jnp.float32)              # [16, 4]

    params = init_params(k_p, IN_CHANNELS, EDGE_DIM)

    # One-time preprocessing for the static graph / fixed weights (not per-call).
    mask, ef = build_dense_graph(edge_index, edge_attr, N_NODES)
    packed = pack_params(params, IN_CHANNELS, EDGE_DIM)

    preds = stock_predict_gnn(x, mask, ef, packed, IN_CHANNELS, EDGE_DIM)
    jax.block_until_ready(preds)
    assert preds.shape == (N_NODES,)
    assert bool(jnp.all(jnp.isfinite(preds)))
    print("KERNEL_OK")
</pallas_src>

<mosaic_0001>
module attributes {stable_mosaic.version = 11 : i64} {
  func.func @kernel(%arg0: memref<8x16xf32, #tpu.memory_space<vmem>>, %arg1: memref<8x8xf32, #tpu.memory_space<vmem>>, %arg2: memref<4x8x8xf32, #tpu.memory_space<vmem>>, %arg3: memref<128x256xf32, #tpu.memory_space<vmem>>, %arg4: memref<1x8xf32, #tpu.memory_space<vmem>>) attributes {dimension_semantics = [], scalar_prefetch = 0 : i64, scratch_operands = 0 : i64, tpu.core_type = #tpu.core_type<tc>} {
    %c0 = arith.constant 0 : index
    %c0_0 = arith.constant 0 : index
    %0 = vector.load %arg0[%c0, %c0_0] : memref<8x16xf32, #tpu.memory_space<vmem>>, vector<8x16xf32>
    %c0_1 = arith.constant 0 : index
    %c0_2 = arith.constant 0 : index
    %1 = vector.load %arg1[%c0_1, %c0_2] : memref<8x8xf32, #tpu.memory_space<vmem>>, vector<8x8xf32>
    %c0_3 = arith.constant 0 : index
    %c0_4 = arith.constant 0 : index
    %c0_5 = arith.constant 0 : index
    %2 = vector.load %arg2[%c0_3, %c0_4, %c0_5] : memref<4x8x8xf32, #tpu.memory_space<vmem>>, vector<4x8x8xf32>
    %cst = arith.constant 1.000000e+00 : f32
    %3 = vector.broadcast %cst : f32 to vector<8x8xf32>
    %4 = arith.subf %1, %3 : vector<8x8xf32>
    %cst_6 = arith.constant 1.000000e+30 : f32
    %5 = vector.broadcast %cst_6 : f32 to vector<8x8xf32>
    %6 = arith.mulf %4, %5 : vector<8x8xf32>
    %c0_7 = arith.constant 0 : index
    %c0_8 = arith.constant 0 : index
    %7 = vector.load %arg3[%c0_7, %c0_8] : memref<128x256xf32, #tpu.memory_space<vmem>>, vector<16x256xf32>
    %c96 = arith.constant 96 : index
    %c0_9 = arith.constant 0 : index
    %8 = vector.load %arg3[%c96, %c0_9] : memref<128x256xf32, #tpu.memory_space<vmem>>, vector<1x256xf32>
    %c80 = arith.constant 80 : index
    %c0_10 = arith.constant 0 : index
    %9 = vector.load %arg3[%c80, %c0_10] : memref<128x256xf32, #tpu.memory_space<vmem>>, vector<4x64xf32>
    %c16 = arith.constant 16 : index
    %c0_11 = arith.constant 0 : index
    %10 = vector.load %arg3[%c16, %c0_11] : memref<128x256xf32, #tpu.memory_space<vmem>>, vector<64x128xf32>
    %c104 = arith.constant 104 : index
    %c0_12 = arith.constant 0 : index
    %11 = vector.load %arg3[%c104, %c0_12] : memref<128x256xf32, #tpu.memory_space<vmem>>, vector<1x128xf32>
    %c88 = arith.constant 88 : index
    %c0_13 = arith.constant 0 : index
    %12 = vector.load %arg3[%c88, %c0_13] : memref<128x256xf32, #tpu.memory_space<vmem>>, vector<4x32xf32>
    %c112 = arith.constant 112 : index
    %c0_14 = arith.constant 0 : index
    %13 = vector.load %arg3[%c112, %c0_14] : memref<128x256xf32, #tpu.memory_space<vmem>>, vector<1x32xf32>
    %c120 = arith.constant 120 : index
    %c0_15 = arith.constant 0 : index
    %14 = vector.load %arg3[%c120, %c0_15] : memref<128x256xf32, #tpu.memory_space<vmem>>, vector<1x1xf32>
    %cst_16 = arith.constant dense<0.000000e+00> : vector<8x256xf32>
    %15 = tpu.matmul %0, %7, %cst_16 {dimension_numbers = #tpu.dot_dimension_numbers<[1], [0], [0], [1], [0, 0, 1, 1], [], []>} : vector<8x16xf32>, vector<16x256xf32>, vector<8x256xf32> -> vector<8x256xf32>
    %16 = vector.broadcast %8 : vector<1x256xf32> to vector<8x256xf32>
    %17 = arith.addf %15, %16 : vector<8x256xf32>
    %18 = vector.extract_strided_slice %17 {offsets = [0, 0], sizes = [8, 64], strides = [1, 1]} : vector<8x256xf32> to vector<8x64xf32>
    %19 = vector.extract_strided_slice %17 {offsets = [0, 64], sizes = [8, 64], strides = [1, 1]} : vector<8x256xf32> to vector<8x64xf32>
    %20 = vector.extract_strided_slice %17 {offsets = [0, 128], sizes = [8, 64], strides = [1, 1]} : vector<8x256xf32> to vector<8x64xf32>
    %21 = vector.extract_strided_slice %17 {offsets = [0, 192], sizes = [8, 64], strides = [1, 1]} : vector<8x256xf32> to vector<8x64xf32>
    %22 = tpu.transpose %19, [1, 0] : vector<8x64xf32> -> vector<64x8xf32>
    %cst_17 = arith.constant dense<0.000000e+00> : vector<8x8xf32>
    %23 = tpu.matmul %18, %22, %cst_17 {dimension_numbers = #tpu.dot_dimension_numbers<[1], [0], [0], [1], [0, 0, 1, 1], [], []>} : vector<8x64xf32>, vector<64x8xf32>, vector<8x8xf32> -> vector<8x8xf32>
    %24 = vector.extract_strided_slice %9 {offsets = [0, 0], sizes = [1, 64], strides = [1, 1]} : vector<4x64xf32> to vector<1x64xf32>
    %25 = vector.broadcast %24 : vector<1x64xf32> to vector<8x64xf32>
    %26 = arith.mulf %18, %25 : vector<8x64xf32>
    %cst_18 = arith.constant dense<0.000000e+00> : vector<8xf32>
    %27 = vector.multi_reduction <add>, %26, %cst_18 [1] : vector<8x64xf32> to vector<8xf32>
    %28 = vector.shape_cast %27 : vector<8xf32> to vector<8x1xf32>
    %29 = vector.extract_strided_slice %2 {offsets = [0, 0, 0], sizes = [1, 8, 8], strides = [1, 1, 1]} : vector<4x8x8xf32> to vector<1x8x8xf32>
    %30 = vector.shape_cast %29 : vector<1x8x8xf32> to vector<8x8xf32>
    %31 = vector.broadcast %28 : vector<8x1xf32> to vector<8x8xf32>
    %32 = arith.mulf %31, %30 : vector<8x8xf32>
    %33 = arith.addf %23, %32 : vector<8x8xf32>
    %34 = vector.extract_strided_slice %9 {offsets = [1, 0], sizes = [1, 64], strides = [1, 1]} : vector<4x64xf32> to vector<1x64xf32>
    %35 = vector.broadcast %34 : vector<1x64xf32> to vector<8x64xf32>
    %36 = arith.mulf %18, %35 : vector<8x64xf32>
    %cst_19 = arith.constant dense<0.000000e+00> : vector<8xf32>
    %37 = vector.multi_reduction <add>, %36, %cst_19 [1] : vector<8x64xf32> to vector<8xf32>
    %38 = vector.shape_cast %37 : vector<8xf32> to vector<8x1xf32>
    %39 = vector.extract_strided_slice %2 {offsets = [1, 0, 0], sizes = [1, 8, 8], strides = [1, 1, 1]} : vector<4x8x8xf32> to vector<1x8x8xf32>
    %40 = vector.shape_cast %39 : vector<1x8x8xf32> to vector<8x8xf32>
    %41 = vector.broadcast %38 : vector<8x1xf32> to vector<8x8xf32>
    %42 = arith.mulf %41, %40 : vector<8x8xf32>
    %43 = arith.addf %33, %42 : vector<8x8xf32>
    %44 = vector.extract_strided_slice %9 {offsets = [2, 0], sizes = [1, 64], strides = [1, 1]} : vector<4x64xf32> to vector<1x64xf32>
    %45 = vector.broadcast %44 : vector<1x64xf32> to vector<8x64xf32>
    %46 = arith.mulf %18, %45 : vector<8x64xf32>
    %cst_20 = arith.constant dense<0.000000e+00> : vector<8xf32>
    %47 = vector.multi_reduction <add>, %46, %cst_20 [1] : vector<8x64xf32> to vector<8xf32>
    %48 = vector.shape_cast %47 : vector<8xf32> to vector<8x1xf32>
    %49 = vector.extract_strided_slice %2 {offsets = [2, 0, 0], sizes = [1, 8, 8], strides = [1, 1, 1]} : vector<4x8x8xf32> to vector<1x8x8xf32>
    %50 = vector.shape_cast %49 : vector<1x8x8xf32> to vector<8x8xf32>
    %51 = vector.broadcast %48 : vector<8x1xf32> to vector<8x8xf32>
    %52 = arith.mulf %51, %50 : vector<8x8xf32>
    %53 = arith.addf %43, %52 : vector<8x8xf32>
    %54 = vector.extract_strided_slice %9 {offsets = [3, 0], sizes = [1, 64], strides = [1, 1]} : vector<4x64xf32> to vector<1x64xf32>
    %55 = vector.broadcast %54 : vector<1x64xf32> to vector<8x64xf32>
    %56 = arith.mulf %18, %55 : vector<8x64xf32>
    %cst_21 = arith.constant dense<0.000000e+00> : vector<8xf32>
    %57 = vector.multi_reduction <add>, %56, %cst_21 [1] : vector<8x64xf32> to vector<8xf32>
    %58 = vector.shape_cast %57 : vector<8xf32> to vector<8x1xf32>
    %59 = vector.extract_strided_slice %2 {offsets = [3, 0, 0], sizes = [1, 8, 8], strides = [1, 1, 1]} : vector<4x8x8xf32> to vector<1x8x8xf32>
    %60 = vector.shape_cast %59 : vector<1x8x8xf32> to vector<8x8xf32>
    %61 = vector.broadcast %58 : vector<8x1xf32> to vector<8x8xf32>
    %62 = arith.mulf %61, %60 : vector<8x8xf32>
    %63 = arith.addf %53, %62 : vector<8x8xf32>
    %cst_22 = arith.constant 1.250000e-01 : f32
    %64 = vector.broadcast %cst_22 : f32 to vector<8x8xf32>
    %65 = arith.mulf %63, %64 : vector<8x8xf32>
    %66 = arith.addf %65, %6 : vector<8x8xf32>
    %cst_23 = arith.constant dense<0xFF800000> : vector<8xf32>
    %67 = vector.multi_reduction <maximumf>, %66, %cst_23 [1] : vector<8x8xf32> to vector<8xf32>
    %68 = vector.shape_cast %67 : vector<8xf32> to vector<8x1xf32>
    %69 = vector.broadcast %68 : vector<8x1xf32> to vector<8x8xf32>
    %70 = arith.subf %66, %69 : vector<8x8xf32>
    %71 = math.exp %70 : vector<8x8xf32>
    %72 = arith.mulf %71, %1 : vector<8x8xf32>
    %cst_24 = arith.constant dense<0.000000e+00> : vector<8xf32>
    %73 = vector.multi_reduction <add>, %72, %cst_24 [1] : vector<8x8xf32> to vector<8xf32>
    %74 = vector.shape_cast %73 : vector<8xf32> to vector<8x1xf32>
    %cst_25 = arith.constant 1.000000e-16 : f32
    %75 = vector.broadcast %cst_25 : f32 to vector<8x1xf32>
    %76 = arith.addf %74, %75 : vector<8x1xf32>
    %77 = vector.broadcast %76 : vector<8x1xf32> to vector<8x8xf32>
    %78 = arith.divf %72, %77 : vector<8x8xf32>
    %cst_26 = arith.constant dense<0.000000e+00> : vector<8x64xf32>
    %79 = tpu.matmul %78, %20, %cst_26 {dimension_numbers = #tpu.dot_dimension_numbers<[1], [0], [0], [1], [0, 0, 1, 1], [], []>} : vector<8x8xf32>, vector<8x64xf32>, vector<8x64xf32> -> vector<8x64xf32>
    %80 = vector.extract_strided_slice %2 {offsets = [0, 0, 0], sizes = [1, 8, 8], strides = [1, 1, 1]} : vector<4x8x8xf32> to vector<1x8x8xf32>
    %81 = vector.shape_cast %80 : vector<1x8x8xf32> to vector<8x8xf32>
    %82 = arith.mulf %78, %81 : vector<8x8xf32>
    %cst_27 = arith.constant dense<0.000000e+00> : vector<8xf32>
    %83 = vector.multi_reduction <add>, %82, %cst_27 [1] : vector<8x8xf32> to vector<8xf32>
    %84 = vector.shape_cast %83 : vector<8xf32> to vector<8x1xf32>
    %85 = vector.extract_strided_slice %9 {offsets = [0, 0], sizes = [1, 64], strides = [1, 1]} : vector<4x64xf32> to vector<1x64xf32>
    %86 = vector.broadcast %84 : vector<8x1xf32> to vector<8x64xf32>
    %87 = vector.broadcast %85 : vector<1x64xf32> to vector<8x64xf32>
    %88 = arith.mulf %86, %87 : vector<8x64xf32>
    %89 = arith.addf %79, %88 : vector<8x64xf32>
    %90 = vector.extract_strided_slice %2 {offsets = [1, 0, 0], sizes = [1, 8, 8], strides = [1, 1, 1]} : vector<4x8x8xf32> to vector<1x8x8xf32>
    %91 = vector.shape_cast %90 : vector<1x8x8xf32> to vector<8x8xf32>
    %92 = arith.mulf %78, %91 : vector<8x8xf32>
    %cst_28 = arith.constant dense<0.000000e+00> : vector<8xf32>
    %93 = vector.multi_reduction <add>, %92, %cst_28 [1] : vector<8x8xf32> to vector<8xf32>
    %94 = vector.shape_cast %93 : vector<8xf32> to vector<8x1xf32>
    %95 = vector.extract_strided_slice %9 {offsets = [1, 0], sizes = [1, 64], strides = [1, 1]} : vector<4x64xf32> to vector<1x64xf32>
    %96 = vector.broadcast %94 : vector<8x1xf32> to vector<8x64xf32>
    %97 = vector.broadcast %95 : vector<1x64xf32> to vector<8x64xf32>
    %98 = arith.mulf %96, %97 : vector<8x64xf32>
    %99 = arith.addf %89, %98 : vector<8x64xf32>
    %100 = vector.extract_strided_slice %2 {offsets = [2, 0, 0], sizes = [1, 8, 8], strides = [1, 1, 1]} : vector<4x8x8xf32> to vector<1x8x8xf32>
    %101 = vector.shape_cast %100 : vector<1x8x8xf32> to vector<8x8xf32>
    %102 = arith.mulf %78, %101 : vector<8x8xf32>
    %cst_29 = arith.constant dense<0.000000e+00> : vector<8xf32>
    %103 = vector.multi_reduction <add>, %102, %cst_29 [1] : vector<8x8xf32> to vector<8xf32>
    %104 = vector.shape_cast %103 : vector<8xf32> to vector<8x1xf32>
    %105 = vector.extract_strided_slice %9 {offsets = [2, 0], sizes = [1, 64], strides = [1, 1]} : vector<4x64xf32> to vector<1x64xf32>
    %106 = vector.broadcast %104 : vector<8x1xf32> to vector<8x64xf32>
    %107 = vector.broadcast %105 : vector<1x64xf32> to vector<8x64xf32>
    %108 = arith.mulf %106, %107 : vector<8x64xf32>
    %109 = arith.addf %99, %108 : vector<8x64xf32>
    %110 = vector.extract_strided_slice %2 {offsets = [3, 0, 0], sizes = [1, 8, 8], strides = [1, 1, 1]} : vector<4x8x8xf32> to vector<1x8x8xf32>
    %111 = vector.shape_cast %110 : vector<1x8x8xf32> to vector<8x8xf32>
    %112 = arith.mulf %78, %111 : vector<8x8xf32>
    %cst_30 = arith.constant dense<0.000000e+00> : vector<8xf32>
    %113 = vector.multi_reduction <add>, %112, %cst_30 [1] : vector<8x8xf32> to vector<8xf32>
    %114 = vector.shape_cast %113 : vector<8xf32> to vector<8x1xf32>
    %115 = vector.extract_strided_slice %9 {offsets = [3, 0], sizes = [1, 64], strides = [1, 1]} : vector<4x64xf32> to vector<1x64xf32>
    %116 = vector.broadcast %114 : vector<8x1xf32> to vector<8x64xf32>
    %117 = vector.broadcast %115 : vector<1x64xf32> to vector<8x64xf32>
    %118 = arith.mulf %116, %117 : vector<8x64xf32>
    %119 = arith.addf %109, %118 : vector<8x64xf32>
    %120 = arith.addf %119, %21 : vector<8x64xf32>
    %cst_31 = arith.constant 0.000000e+00 : f32
    %121 = vector.broadcast %cst_31 : f32 to vector<8x64xf32>
    %122 = arith.maximumf %120, %121 : vector<8x64xf32>
    %cst_32 = arith.constant dense<0.000000e+00> : vector<8x128xf32>
    %123 = tpu.matmul %122, %10, %cst_32 {dimension_numbers = #tpu.dot_dimension_numbers<[1], [0], [0], [1], [0, 0, 1, 1], [], []>} : vector<8x64xf32>, vector<64x128xf32>, vector<8x128xf32> -> vector<8x128xf32>
    %124 = vector.broadcast %11 : vector<1x128xf32> to vector<8x128xf32>
    %125 = arith.addf %123, %124 : vector<8x128xf32>
    %126 = vector.extract_strided_slice %125 {offsets = [0, 0], sizes = [8, 32], strides = [1, 1]} : vector<8x128xf32> to vector<8x32xf32>
    %127 = vector.extract_strided_slice %125 {offsets = [0, 32], sizes = [8, 32], strides = [1, 1]} : vector<8x128xf32> to vector<8x32xf32>
    %128 = vector.extract_strided_slice %125 {offsets = [0, 64], sizes = [8, 32], strides = [1, 1]} : vector<8x128xf32> to vector<8x32xf32>
    %129 = vector.extract_strided_slice %125 {offsets = [0, 96], sizes = [8, 32], strides = [1, 1]} : vector<8x128xf32> to vector<8x32xf32>
    %130 = tpu.transpose %127, [1, 0] : vector<8x32xf32> -> vector<32x8xf32>
    %cst_33 = arith.constant dense<0.000000e+00> : vector<8x8xf32>
    %131 = tpu.matmul %126, %130, %cst_33 {dimension_numbers = #tpu.dot_dimension_numbers<[1], [0], [0], [1], [0, 0, 1, 1], [], []>} : vector<8x32xf32>, vector<32x8xf32>, vector<8x8xf32> -> vector<8x8xf32>
    %132 = vector.extract_strided_slice %12 {offsets = [0, 0], sizes = [1, 32], strides = [1, 1]} : vector<4x32xf32> to vector<1x32xf32>
    %133 = vector.broadcast %132 : vector<1x32xf32> to vector<8x32xf32>
    %134 = arith.mulf %126, %133 : vector<8x32xf32>
    %cst_34 = arith.constant dense<0.000000e+00> : vector<8xf32>
    %135 = vector.multi_reduction <add>, %134, %cst_34 [1] : vector<8x32xf32> to vector<8xf32>
    %136 = vector.shape_cast %135 : vector<8xf32> to vector<8x1xf32>
    %137 = vector.extract_strided_slice %2 {offsets = [0, 0, 0], sizes = [1, 8, 8], strides = [1, 1, 1]} : vector<4x8x8xf32> to vector<1x8x8xf32>
    %138 = vector.shape_cast %137 : vector<1x8x8xf32> to vector<8x8xf32>
    %139 = vector.broadcast %136 : vector<8x1xf32> to vector<8x8xf32>
    %140 = arith.mulf %139, %138 : vector<8x8xf32>
    %141 = arith.addf %131, %140 : vector<8x8xf32>
    %142 = vector.extract_strided_slice %12 {offsets = [1, 0], sizes = [1, 32], strides = [1, 1]} : vector<4x32xf32> to vector<1x32xf32>
    %143 = vector.broadcast %142 : vector<1x32xf32> to vector<8x32xf32>
    %144 = arith.mulf %126, %143 : vector<8x32xf32>
    %cst_35 = arith.constant dense<0.000000e+00> : vector<8xf32>
    %145 = vector.multi_reduction <add>, %144, %cst_35 [1] : vector<8x32xf32> to vector<8xf32>
    %146 = vector.shape_cast %145 : vector<8xf32> to vector<8x1xf32>
    %147 = vector.extract_strided_slice %2 {offsets = [1, 0, 0], sizes = [1, 8, 8], strides = [1, 1, 1]} : vector<4x8x8xf32> to vector<1x8x8xf32>
    %148 = vector.shape_cast %147 : vector<1x8x8xf32> to vector<8x8xf32>
    %149 = vector.broadcast %146 : vector<8x1xf32> to vector<8x8xf32>
    %150 = arith.mulf %149, %148 : vector<8x8xf32>
    %151 = arith.addf %141, %150 : vector<8x8xf32>
    %152 = vector.extract_strided_slice %12 {offsets = [2, 0], sizes = [1, 32], strides = [1, 1]} : vector<4x32xf32> to vector<1x32xf32>
    %153 = vector.broadcast %152 : vector<1x32xf32> to vector<8x32xf32>
    %154 = arith.mulf %126, %153 : vector<8x32xf32>
    %cst_36 = arith.constant dense<0.000000e+00> : vector<8xf32>
    %155 = vector.multi_reduction <add>, %154, %cst_36 [1] : vector<8x32xf32> to vector<8xf32>
    %156 = vector.shape_cast %155 : vector<8xf32> to vector<8x1xf32>
    %157 = vector.extract_strided_slice %2 {offsets = [2, 0, 0], sizes = [1, 8, 8], strides = [1, 1, 1]} : vector<4x8x8xf32> to vector<1x8x8xf32>
    %158 = vector.shape_cast %157 : vector<1x8x8xf32> to vector<8x8xf32>
    %159 = vector.broadcast %156 : vector<8x1xf32> to vector<8x8xf32>
    %160 = arith.mulf %159, %158 : vector<8x8xf32>
    %161 = arith.addf %151, %160 : vector<8x8xf32>
    %162 = vector.extract_strided_slice %12 {offsets = [3, 0], sizes = [1, 32], strides = [1, 1]} : vector<4x32xf32> to vector<1x32xf32>
    %163 = vector.broadcast %162 : vector<1x32xf32> to vector<8x32xf32>
    %164 = arith.mulf %126, %163 : vector<8x32xf32>
    %cst_37 = arith.constant dense<0.000000e+00> : vector<8xf32>
    %165 = vector.multi_reduction <add>, %164, %cst_37 [1] : vector<8x32xf32> to vector<8xf32>
    %166 = vector.shape_cast %165 : vector<8xf32> to vector<8x1xf32>
    %167 = vector.extract_strided_slice %2 {offsets = [3, 0, 0], sizes = [1, 8, 8], strides = [1, 1, 1]} : vector<4x8x8xf32> to vector<1x8x8xf32>
    %168 = vector.shape_cast %167 : vector<1x8x8xf32> to vector<8x8xf32>
    %169 = vector.broadcast %166 : vector<8x1xf32> to vector<8x8xf32>
    %170 = arith.mulf %169, %168 : vector<8x8xf32>
    %171 = arith.addf %161, %170 : vector<8x8xf32>
    %cst_38 = arith.constant 0.176776692 : f32
    %172 = vector.broadcast %cst_38 : f32 to vector<8x8xf32>
    %173 = arith.mulf %171, %172 : vector<8x8xf32>
    %174 = arith.addf %173, %6 : vector<8x8xf32>
    %cst_39 = arith.constant dense<0xFF800000> : vector<8xf32>
    %175 = vector.multi_reduction <maximumf>, %174, %cst_39 [1] : vector<8x8xf32> to vector<8xf32>
    %176 = vector.shape_cast %175 : vector<8xf32> to vector<8x1xf32>
    %177 = vector.broadcast %176 : vector<8x1xf32> to vector<8x8xf32>
    %178 = arith.subf %174, %177 : vector<8x8xf32>
    %179 = math.exp %178 : vector<8x8xf32>
    %180 = arith.mulf %179, %1 : vector<8x8xf32>
    %cst_40 = arith.constant dense<0.000000e+00> : vector<8xf32>
    %181 = vector.multi_reduction <add>, %180, %cst_40 [1] : vector<8x8xf32> to vector<8xf32>
    %182 = vector.shape_cast %181 : vector<8xf32> to vector<8x1xf32>
    %cst_41 = arith.constant 1.000000e-16 : f32
    %183 = vector.broadcast %cst_41 : f32 to vector<8x1xf32>
    %184 = arith.addf %182, %183 : vector<8x1xf32>
    %185 = vector.broadcast %184 : vector<8x1xf32> to vector<8x8xf32>
    %186 = arith.divf %180, %185 : vector<8x8xf32>
    %cst_42 = arith.constant dense<0.000000e+00> : vector<8x32xf32>
    %187 = tpu.matmul %186, %128, %cst_42 {dimension_numbers = #tpu.dot_dimension_numbers<[1], [0], [0], [1], [0, 0, 1, 1], [], []>} : vector<8x8xf32>, vector<8x32xf32>, vector<8x32xf32> -> vector<8x32xf32>
    %188 = vector.extract_strided_slice %2 {offsets = [0, 0, 0], sizes = [1, 8, 8], strides = [1, 1, 1]} : vector<4x8x8xf32> to vector<1x8x8xf32>
    %189 = vector.shape_cast %188 : vector<1x8x8xf32> to vector<8x8xf32>
    %190 = arith.mulf %186, %189 : vector<8x8xf32>
    %cst_43 = arith.constant dense<0.000000e+00> : vector<8xf32>
    %191 = vector.multi_reduction <add>, %190, %cst_43 [1] : vector<8x8xf32> to vector<8xf32>
    %192 = vector.shape_cast %191 : vector<8xf32> to vector<8x1xf32>
    %193 = vector.extract_strided_slice %12 {offsets = [0, 0], sizes = [1, 32], strides = [1, 1]} : vector<4x32xf32> to vector<1x32xf32>
    %194 = vector.broadcast %192 : vector<8x1xf32> to vector<8x32xf32>
    %195 = vector.broadcast %193 : vector<1x32xf32> to vector<8x32xf32>
    %196 = arith.mulf %194, %195 : vector<8x32xf32>
    %197 = arith.addf %187, %196 : vector<8x32xf32>
    %198 = vector.extract_strided_slice %2 {offsets = [1, 0, 0], sizes = [1, 8, 8], strides = [1, 1, 1]} : vector<4x8x8xf32> to vector<1x8x8xf32>
    %199 = vector.shape_cast %198 : vector<1x8x8xf32> to vector<8x8xf32>
    %200 = arith.mulf %186, %199 : vector<8x8xf32>
    %cst_44 = arith.constant dense<0.000000e+00> : vector<8xf32>
    %201 = vector.multi_reduction <add>, %200, %cst_44 [1] : vector<8x8xf32> to vector<8xf32>
    %202 = vector.shape_cast %201 : vector<8xf32> to vector<8x1xf32>
    %203 = vector.extract_strided_slice %12 {offsets = [1, 0], sizes = [1, 32], strides = [1, 1]} : vector<4x32xf32> to vector<1x32xf32>
    %204 = vector.broadcast %202 : vector<8x1xf32> to vector<8x32xf32>
    %205 = vector.broadcast %203 : vector<1x32xf32> to vector<8x32xf32>
    %206 = arith.mulf %204, %205 : vector<8x32xf32>
    %207 = arith.addf %197, %206 : vector<8x32xf32>
    %208 = vector.extract_strided_slice %2 {offsets = [2, 0, 0], sizes = [1, 8, 8], strides = [1, 1, 1]} : vector<4x8x8xf32> to vector<1x8x8xf32>
    %209 = vector.shape_cast %208 : vector<1x8x8xf32> to vector<8x8xf32>
    %210 = arith.mulf %186, %209 : vector<8x8xf32>
    %cst_45 = arith.constant dense<0.000000e+00> : vector<8xf32>
    %211 = vector.multi_reduction <add>, %210, %cst_45 [1] : vector<8x8xf32> to vector<8xf32>
    %212 = vector.shape_cast %211 : vector<8xf32> to vector<8x1xf32>
    %213 = vector.extract_strided_slice %12 {offsets = [2, 0], sizes = [1, 32], strides = [1, 1]} : vector<4x32xf32> to vector<1x32xf32>
    %214 = vector.broadcast %212 : vector<8x1xf32> to vector<8x32xf32>
    %215 = vector.broadcast %213 : vector<1x32xf32> to vector<8x32xf32>
    %216 = arith.mulf %214, %215 : vector<8x32xf32>
    %217 = arith.addf %207, %216 : vector<8x32xf32>
    %218 = vector.extract_strided_slice %2 {offsets = [3, 0, 0], sizes = [1, 8, 8], strides = [1, 1, 1]} : vector<4x8x8xf32> to vector<1x8x8xf32>
    %219 = vector.shape_cast %218 : vector<1x8x8xf32> to vector<8x8xf32>
    %220 = arith.mulf %186, %219 : vector<8x8xf32>
    %cst_46 = arith.constant dense<0.000000e+00> : vector<8xf32>
    %221 = vector.multi_reduction <add>, %220, %cst_46 [1] : vector<8x8xf32> to vector<8xf32>
    %222 = vector.shape_cast %221 : vector<8xf32> to vector<8x1xf32>
    %223 = vector.extract_strided_slice %12 {offsets = [3, 0], sizes = [1, 32], strides = [1, 1]} : vector<4x32xf32> to vector<1x32xf32>
    %224 = vector.broadcast %222 : vector<8x1xf32> to vector<8x32xf32>
    %225 = vector.broadcast %223 : vector<1x32xf32> to vector<8x32xf32>
    %226 = arith.mulf %224, %225 : vector<8x32xf32>
    %227 = arith.addf %217, %226 : vector<8x32xf32>
    %228 = arith.addf %227, %129 : vector<8x32xf32>
    %cst_47 = arith.constant 0.000000e+00 : f32
    %229 = vector.broadcast %cst_47 : f32 to vector<8x32xf32>
    %230 = arith.maximumf %228, %229 : vector<8x32xf32>
    %231 = tpu.transpose %230, [1, 0] : vector<8x32xf32> -> vector<32x8xf32>
    %cst_48 = arith.constant dense<0.000000e+00> : vector<1x8xf32>
    %232 = tpu.matmul %13, %231, %cst_48 {dimension_numbers = #tpu.dot_dimension_numbers<[1], [0], [0], [1], [0, 0, 1, 1], [], []>} : vector<1x32xf32>, vector<32x8xf32>, vector<1x8xf32> -> vector<1x8xf32>
    %233 = vector.broadcast %14 : vector<1x1xf32> to vector<1x8xf32>
    %234 = arith.addf %232, %233 : vector<1x8xf32>
    %235 = arith.negf %234 : vector<1x8xf32>
    %236 = math.exp %235 : vector<1x8xf32>
    %cst_49 = arith.constant 1.000000e+00 : f32
    %237 = vector.broadcast %cst_49 : f32 to vector<1x8xf32>
    %238 = arith.addf %237, %236 : vector<1x8xf32>
    %239 = arith.divf %237, %238 : vector<1x8xf32>
    %c0_50 = arith.constant 0 : index
    %c0_51 = arith.constant 0 : index
    %240 = vector.load %arg4[%c0_50, %c0_51] : memref<1x8xf32, #tpu.memory_space<vmem>>, vector<1x8xf32>
    tpu.vector_store %arg4[%c0_50, %c0_51], %239 {strides = array<i32>} : memref<1x8xf32, #tpu.memory_space<vmem>>, vector<1x8xf32>,
    return
  }
}

</mosaic_0001>

<llo_original>
// kernel: tpu_custom_call.1
$region0: #{tpu_custom_call.1}
  #allocation0 [shape = 'u32[]', space=smem, size = 0x4, offset = 0x4, fixed_abs, tag = 'smem constant byte address 0x4 - core index']
  #allocation1 [shape = 'u32[72,128]{1,0:T(1,128)}', space=vmem, size = 0x9000, scoped, tag = 'internal scratch']
  %s0 = inlined_call_operand.hbm [shape: f32[8,16], index: 0, kind: input, shape index: {}]
  %s1 = inlined_call_operand.hbm [shape: f32[8,8], index: 1, kind: input, shape index: {}]
  %s2 = inlined_call_operand.hbm [shape: f32[4,8,8], index: 2, kind: input, shape index: {}]
  %s3 = inlined_call_operand.hbm [shape: f32[128,256], index: 3, kind: input, shape index: {}]
  %s4 = inlined_call_operand.hbm [shape: f32[1,8], index: 4, kind: output, shape index: {}]
  %s5 = sld [smem:[#allocation0]]
  $region42: #{tpu_custom_call.1} parent=0
    _
  %s7 = ssub.s32 1, %s5
  %s8 = scalar_select 0, %s7, %s5
  $region1: #{tpu_custom_call.1} parent=0
    #allocation2 [shape = 'u8[4096]{0}', space=vmem, size = 0x1000, scoped, tag = 'input window, operand 0, single buffered']
    #allocation3 [shape = 's32[1]{0}', space=sflag, size = 0x4, scoped, tag = 'scoped memory for tpu_custom_call.1']
    #allocation4 [shape = 's32[1]{0}', space=sflag, size = 0x4, scoped, tag = 'scoped memory for tpu_custom_call.1']
    #allocation5 [shape = 'u8[4096]{0}', space=vmem, size = 0x1000, scoped, tag = 'input window, operand 1, single buffered']
    #allocation6 [shape = 's32[1]{0}', space=sflag, size = 0x4, scoped, tag = 'scoped memory for tpu_custom_call.1']
    #allocation7 [shape = 'u8[16384]{0}', space=vmem, size = 0x4000, scoped, tag = 'input window, operand 2, single buffered']
    #allocation8 [shape = 'u8[131072]{0}', space=vmem, size = 0x20000, scoped, tag = 'input window, operand 3, single buffered']
    #allocation9 [shape = 's32[1]{0}', space=sflag, size = 0x4, scoped, tag = 'scoped memory for tpu_custom_call.1']
    #allocation10 [shape = 'u8[512]{0}', space=vmem, size = 0x400, scoped, tag = 'output window, operand 0, single buffered']
    %9 = vsyncpa [#allocation3], 0
    %10 = vsyncpa [#allocation6], 0
    %11 = vsyncpa [#allocation9], 0
    %12 = vsyncpa [#allocation4], 0
    // Predicated region
    $region2: #{tpu_custom_call.1} parent=1 // pred_check
      _
    $region3: #{tpu_custom_call.1} parent=1 // pred_check_branch
      %14 = sbr.rel (0) target = $region5
    $region4: #{tpu_custom_call.1} parent=1 // pred_region
      %16 = vsyncadd [#allocation3], 0
      %s18 = sshll.u32 %s0, 4
      %s19 = int_to_ptr.hbm [resolvable:$true] %s18
      %s20 = sshll.u32 [#allocation2], 4
      %s21 = int_to_ptr.vmem [resolvable:$true] %s20
      %23 = dma.hbm_to_vmem [thread:$0]  %s19, 128, %s21, [#allocation3]
    $region5: #{tpu_custom_call.1} parent=1 // pred_fallthru
      _
    // Predicated region
    $region6: #{tpu_custom_call.1} parent=1 // pred_check
      _
    $region7: #{tpu_custom_call.1} parent=1 // pred_check_branch
      %25 = sbr.rel (0) target = $region9
    $region8: #{tpu_custom_call.1} parent=1 // pred_region
      %27 = vsyncadd [#allocation6], 0
      %s29 = sshll.u32 %s1, 4
      %s30 = int_to_ptr.hbm [resolvable:$true] %s29
      %s31 = sshll.u32 [#allocation5], 4
      %s32 = int_to_ptr.vmem [resolvable:$true] %s31
      %34 = dma.hbm_to_vmem [thread:$0]  %s30, 128, %s32, [#allocation6]
    $region9: #{tpu_custom_call.1} parent=1 // pred_fallthru
      _
    // Predicated region
    $region10: #{tpu_custom_call.1} parent=1 // pred_check
      _
    $region11: #{tpu_custom_call.1} parent=1 // pred_check_branch
      %36 = sbr.rel (0) target = $region13
    $region12: #{tpu_custom_call.1} parent=1 // pred_region
      %38 = vsyncadd [#allocation6], 0
      %s39 = sshll.u32 %s2, 4
      %s40 = int_to_ptr.hbm [resolvable:$true] %s39
      %s41 = sshll.u32 [#allocation7], 4
      %s42 = int_to_ptr.vmem [resolvable:$true] %s41
      %47 = dma.hbm_to_vmem [thread:$0]  %s40, 512, %s42, [#allocation6], 128, 128, 8
    $region13: #{tpu_custom_call.1} parent=1 // pred_fallthru
      _
    // Predicated region
    $region14: #{tpu_custom_call.1} parent=1 // pred_check
      _
    $region15: #{tpu_custom_call.1} parent=1 // pred_check_branch
      %49 = sbr.rel (0) target = $region17
    $region16: #{tpu_custom_call.1} parent=1 // pred_region
      %51 = vsyncadd [#allocation9], 0
      %s52 = sshll.u32 %s3, 4
      %s53 = int_to_ptr.hbm [resolvable:$true] %s52
      %s54 = sshll.u32 [#allocation8], 4
      %s55 = int_to_ptr.vmem [resolvable:$true] %s54
      %60 = dma.hbm_to_vmem [thread:$0]  %s53, 4096, %s55, [#allocation9], 256, 256, 16
    $region17: #{tpu_custom_call.1} parent=1 // pred_fallthru
      _
    // Predicated region
    $region18: #{tpu_custom_call.1} parent=1 // pred_check
      _
    $region19: #{tpu_custom_call.1} parent=1 // pred_check_branch
      %62 = sbr.rel (0) target = $region21
    $region20: #{tpu_custom_call.1} parent=1 // pred_region
      %64 = dma.done [#allocation3], 128
    $region21: #{tpu_custom_call.1} parent=1 // pred_fallthru
      _
    // Predicated region
    $region22: #{tpu_custom_call.1} parent=1 // pred_check
      _
    $region23: #{tpu_custom_call.1} parent=1 // pred_check_branch
      %66 = sbr.rel (0) target = $region25
    $region24: #{tpu_custom_call.1} parent=1 // pred_region
      %68 = dma.done [#allocation6], 128
    $region25: #{tpu_custom_call.1} parent=1 // pred_fallthru
      _
    // Predicated region
    $region26: #{tpu_custom_call.1} parent=1 // pred_check
      _
    $region27: #{tpu_custom_call.1} parent=1 // pred_check_branch
      %70 = sbr.rel (0) target = $region29
    $region28: #{tpu_custom_call.1} parent=1 // pred_region
      %72 = dma.done [#allocation6], 512
    $region29: #{tpu_custom_call.1} parent=1 // pred_fallthru
      _
    // Predicated region
    $region30: #{tpu_custom_call.1} parent=1 // pred_check
      _
    $region31: #{tpu_custom_call.1} parent=1 // pred_check_branch
      %74 = sbr.rel (0) target = $region33
    $region32: #{tpu_custom_call.1} parent=1 // pred_region
      %76 = dma.done [#allocation9], 4096
    $region33: #{tpu_custom_call.1} parent=1 // pred_fallthru
      _
    %v77 = vld [vmem:[#allocation2] sm:$0xff]
    %v78 = vld [vmem:[#allocation5] sm:$0xff]
    %v79 = vld [vmem:[#allocation7] sm:$0xff]
    %v80 = vld [vmem:[#allocation7 + $0x8] sm:$0xff]
    %v81 = vld [vmem:[#allocation7 + $0x10] sm:$0xff]
    %v82 = vld [vmem:[#allocation7 + $0x18] sm:$0xff]
    %v83 = vsub.f32 %v78, 1.0
    %v84 = vmul.f32 %v83, 1e+30
    %v85 = vld [vmem:[#allocation8] sm:$0xff]
    %v86 = vld [vmem:[#allocation8 + $0x8] sm:$0xff]
    %v87 = vld [vmem:[#allocation8 + $0x10] sm:$0xff]
    %v88 = vld [vmem:[#allocation8 + $0x18] sm:$0xff]
    %s89 = scalar_lea.vmem [#allocation8], 192
    %v90 = vld [vmem:[%s89] ss:$8 sm:$0x3]
    %v91 = vld [vmem:[#allocation8 + $0xa0] sm:$0xf]
    %v92 = vld [vmem:[#allocation8 + $0x20] sm:$0xff]
    %v93 = vld [vmem:[#allocation8 + $0x30] sm:$0xff]
    %v94 = vld [vmem:[#allocation8 + $0x40] sm:$0xff]
    %v95 = vld [vmem:[#allocation8 + $0x50] sm:$0xff]
    %v96 = vld [vmem:[#allocation8 + $0x60] sm:$0xff]
    %v97 = vld [vmem:[#allocation8 + $0x70] sm:$0xff]
    %v98 = vld [vmem:[#allocation8 + $0x80] sm:$0xff]
    %v99 = vld [vmem:[#allocation8 + $0x90] sm:$0xff]
    %v100 = vld [vmem:[#allocation8 + $0xd0] ss:$0 sm:$0xff]
    %v101 = vld [vmem:[#allocation8 + $0xb0] sm:$0xf]
    %v102 = vld [vmem:[#allocation8 + $0xe0] ss:$0 sm:$0xff]
    %v103 = vld [vmem:[#allocation8 + $0xf0] ss:$0 sm:$0xff]
    %v105 = vperm.slane %v90, 0
    %v106 = vperm.slane %v90, 1
    %vm109 = vcmask 130048
    %v111 = vsel %vm109, %v77, 0
    %113 = vmatpush.msra.mxu0 0.0
    %114 = vmatpush.msra.mxu0 0.0
    %115 = vmatpush.msra.mxu0 0.0
    %116 = vmatpush.msra.mxu0 0.0
    %117 = vmatpush.msra.mxu0 0.0
    %118 = vmatpush.msra.mxu0 0.0
    %119 = vmatpush.msra.mxu0 0.0
    %120 = vmatpush.msra.mxu0 0.0
    %121 = vmatpush.msra.mxu0 0.0
    %122 = vmatpush.msra.mxu0 0.0
    %123 = vmatpush.msra.mxu0 0.0
    %124 = vmatpush.msra.mxu0 0.0
    %125 = vmatpush.msra.mxu0 0.0
    %126 = vmatpush.msra.mxu0 0.0
    %127 = vmatpush.msra.mxu0 %v87
    %128 = vmatpush.msra.mxu0 %v85
    %129 = vmatmul.f32.gmra.mxu0 %v111
    %v130 = vpop.f32.mrf.mxu0
    %v131 = vadd.f32 %v105, %v130
    %132 = vdwg.mxu0
    %133 = vmatpush.msra.mxu0 0.0
    %134 = vmatpush.msra.mxu0 0.0
    %135 = vmatpush.msra.mxu0 0.0
    %136 = vmatpush.msra.mxu0 0.0
    %137 = vmatpush.msra.mxu0 0.0
    %138 = vmatpush.msra.mxu0 0.0
    %139 = vmatpush.msra.mxu0 0.0
    %140 = vmatpush.msra.mxu0 0.0
    %141 = vmatpush.msra.mxu0 0.0
    %142 = vmatpush.msra.mxu0 0.0
    %143 = vmatpush.msra.mxu0 0.0
    %144 = vmatpush.msra.mxu0 0.0
    %145 = vmatpush.msra.mxu0 0.0
    %146 = vmatpush.msra.mxu0 0.0
    %147 = vmatpush.msra.mxu0 %v88
    %148 = vmatpush.msra.mxu0 %v86
    %149 = vmatmul.f32.gmra.mxu0 %v111
    %v150 = vpop.f32.mrf.mxu0
    %v151 = vadd.f32 %v106, %v150
    %152 = vdwg.mxu0
    %v153 = vperm.slane %v91, 0
    %v154 = vmul.f32 %v131, %v153
    %vm155 = vcmask 523264
    %v156 = vsel %vm155, %v154, 0.0
    %157 = vadd.xlane.f32.xlu0 %v156
    %v158 = vpop.xlane.xlu0 %157
    %v159 = vmul.f32 %v158, %v79
    %161 = vrot.lane.b32.xlu0 %v131, 64
    %v162 = vpop.permute.xlu0 %161
    %v163 = vsel %vm155, %v131, 0
    %v165 = vsel %vm155, %v162, 0
    %167 = vmatpush.xpose.msra.mxu0 0.0
    %168 = vmatpush.xpose.msra.mxu0 0.0
    %169 = vmatpush.xpose.msra.mxu0 0.0
    %170 = vmatpush.xpose.msra.mxu0 0.0
    %171 = vmatpush.xpose.msra.mxu0 0.0
    %172 = vmatpush.xpose.msra.mxu0 0.0
    %173 = vmatpush.xpose.msra.mxu0 0.0
    %174 = vmatpush.xpose.msra.mxu0 0.0
    %175 = vmatpush.xpose.msra.mxu0 0.0
    %176 = vmatpush.xpose.msra.mxu0 0.0
    %177 = vmatpush.xpose.msra.mxu0 0.0
    %178 = vmatpush.xpose.msra.mxu0 0.0
    %179 = vmatpush.xpose.msra.mxu0 0.0
    %180 = vmatpush.xpose.msra.mxu0 0.0
    %181 = vmatpush.xpose.msra.mxu0 0.0
    %182 = vmatpush.xpose.msra.mxu0 %v165
    %183 = vmatmul.f32.gmra.mxu0 %v163
    %v184 = vpop.f32.mrf.mxu0
    %v185 = vadd.f32 %v159, %v184
    %186 = vdwg.mxu0
    %v187 = vperm.slane %v91, 1
    %v188 = vmul.f32 %v131, %v187
    %v189 = vsel %vm155, %v188, 0.0
    %190 = vadd.xlane.f32.xlu0 %v189
    %v191 = vpop.xlane.xlu0 %190
    %v192 = vmul.f32 %v191, %v80
    %v193 = vadd.f32 %v185, %v192
    %v194 = vperm.slane %v91, 2
    %v195 = vmul.f32 %v131, %v194
    %v196 = vsel %vm155, %v195, 0.0
    %197 = vadd.xlane.f32.xlu0 %v196
    %v198 = vpop.xlane.xlu0 %197
    %v199 = vmul.f32 %v198, %v81
    %v200 = vadd.f32 %v193, %v199
    %v201 = vperm.slane %v91, 3
    %v202 = vmul.f32 %v131, %v201
    %v203 = vsel %vm155, %v202, 0.0
    %204 = vadd.xlane.f32.xlu0 %v203
    %v205 = vpop.xlane.xlu0 %204
    %v206 = vmul.f32 %v205, %v82
    %v207 = vadd.f32 %v200, %v206
    %v208 = vmul.f32 %v207, 0.125
    %v209 = vadd.f32 %v208, %v84
    %vm210 = vcmask 64512
    %v211 = vsel %vm210, %v209, -inf
    %212 = vmax.xlane.f32.xlu0 %v211
    %v213 = vpop.xlane.xlu0 %212
    %v214 = vsub.f32 %v209, %v213
    %v215 = vmul.f32 %v214, 1.442695
    %v216 = vpow.pop %v215
    %v217 = vmul.f32 %v216, %v78
    %v218 = vsel %vm210, %v217, 0.0
    %219 = vadd.xlane.f32.xlu0 %v218
    %v220 = vpop.xlane.xlu0 %219
    %v221 = vadd.f32 %v220, 1e-16
    %v222 = vrcp.pop %v221
    %v223 = vmul.f32 %v221, %v222
    %v224 = vsub.f32 1.0, %v223
    %v225 = vmul.f32 %v222, %v224
    %v226 = vadd.f32 %v222, %v225
    %vm227 = vweird.f32 %v221
    %vm228 = vweird.f32 %v222
    %vm229 = vmor %vm227, %vm228
    %v230 = vsel %vm229, %v222, %v226
    %v231 = vand.u32 2147483647, %v221
    %vm232 = vcmp.eq.f32.partialorder %v231, 8.507059e+37
    %v233 = vand.u32 %v221, 2147483648
    %v234 = vor.u32 1.1754944e-38, %v233
    %v235 = vsel %vm232, %v234, %v230
    %v236 = vmul.f32 %v217, %v235
    %v237 = vmul.f32 %v236, %v79
    %v238 = vsel %vm210, %v237, 0.0
    %239 = vadd.xlane.f32.xlu0 %v238
    %v240 = vpop.xlane.xlu0 %239
    %v241 = vmul.f32 %v240, %v153
    %v243 = vsel %vm210, %v236, 0
    %245 = vmatpush.msra.mxu0 0.0
    %246 = vmatpush.msra.mxu0 0.0
    %247 = vmatpush.msra.mxu0 0.0
    %248 = vmatpush.msra.mxu0 0.0
    %249 = vmatpush.msra.mxu0 0.0
    %250 = vmatpush.msra.mxu0 0.0
    %251 = vmatpush.msra.mxu0 0.0
    %252 = vmatpush.msra.mxu0 0.0
    %253 = vmatpush.msra.mxu0 0.0
    %254 = vmatpush.msra.mxu0 0.0
    %255 = vmatpush.msra.mxu0 0.0
    %256 = vmatpush.msra.mxu0 0.0
    %257 = vmatpush.msra.mxu0 0.0
    %258 = vmatpush.msra.mxu0 0.0
    %259 = vmatpush.msra.mxu0 0.0
    %260 = vmatpush.msra.mxu0 %v151
    %261 = vmatmul.f32.gmra.mxu0 %v243
    %v262 = vpop.f32.mrf.mxu0
    %v263 = vadd.f32 %v241, %v262
    %264 = vdwg.mxu0
    %v265 = vmul.f32 %v236, %v80
    %v266 = vsel %vm210, %v265, 0.0
    %267 = vadd.xlane.f32.xlu0 %v266
    %v268 = vpop.xlane.xlu0 %267
    %v269 = vmul.f32 %v268, %v187
    %v270 = vadd.f32 %v263, %v269
    %v271 = vmul.f32 %v236, %v81
    %v272 = vsel %vm210, %v271, 0.0
    %273 = vadd.xlane.f32.xlu0 %v272
    %v274 = vpop.xlane.xlu0 %273
    %v275 = vmul.f32 %v274, %v194
    %v276 = vadd.f32 %v270, %v275
    %v277 = vmul.f32 %v236, %v82
    %v278 = vsel %vm210, %v277, 0.0
    %279 = vadd.xlane.f32.xlu0 %v278
    %v280 = vpop.xlane.xlu0 %279
    %v281 = vmul.f32 %v280, %v201
    %v282 = vadd.f32 %v276, %v281
    %284 = vrot.lane.b32.xlu0 %v151, 64
    %v285 = vpop.permute.xlu0 %284
    %v287 = vadd.f32 %v282, %v285
    %v288 = vmax.f32 %v287, 0.0
    %v290 = vsel %vm155, %v288, 0
    %292 = vmatpush.msra.mxu0 0.0
    %293 = vmatpush.msra.mxu0 0.0
    %294 = vmatpush.msra.mxu0 0.0
    %295 = vmatpush.msra.mxu0 0.0
    %296 = vmatpush.msra.mxu0 0.0
    %297 = vmatpush.msra.mxu0 0.0
    %298 = vmatpush.msra.mxu0 0.0
    %299 = vmatpush.msra.mxu0 0.0
    %300 = vmatpush.msra.mxu0 %v99
    %301 = vmatpush.msra.mxu0 %v98
    %302 = vmatpush.msra.mxu0 %v97
    %303 = vmatpush.msra.mxu0 %v96
    %304 = vmatpush.msra.mxu0 %v95
    %305 = vmatpush.msra.mxu0 %v94
    %306 = vmatpush.msra.mxu0 %v93
    %307 = vmatpush.msra.mxu0 %v92
    %308 = vmatmul.f32.gmra.mxu0 %v290
    %v309 = vpop.f32.mrf.mxu0
    %v310 = vadd.f32 %v100, %v309
    %311 = vdwg.mxu0
    %v312 = vperm.slane %v101, 0
    %v313 = vmul.f32 %v310, %v312
    %vm314 = vcmask 261120
    %v315 = vsel %vm314, %v313, 0.0
    %316 = vadd.xlane.f32.xlu0 %v315
    %v317 = vpop.xlane.xlu0 %316
    %v318 = vmul.f32 %v317, %v79
    %320 = vrot.lane.b32.xlu0 %v310, 96
    %v321 = vpop.permute.xlu0 %320
    %v322 = vsel %vm314, %v310, 0
    %v324 = vsel %vm314, %v321, 0
    %326 = vmatpush.xpose.msra.mxu0 0.0
    %327 = vmatpush.xpose.msra.mxu0 0.0
    %328 = vmatpush.xpose.msra.mxu0 0.0
    %329 = vmatpush.xpose.msra.mxu0 0.0
    %330 = vmatpush.xpose.msra.mxu0 0.0
    %331 = vmatpush.xpose.msra.mxu0 0.0
    %332 = vmatpush.xpose.msra.mxu0 0.0
    %333 = vmatpush.xpose.msra.mxu0 0.0
    %334 = vmatpush.xpose.msra.mxu0 0.0
    %335 = vmatpush.xpose.msra.mxu0 0.0
    %336 = vmatpush.xpose.msra.mxu0 0.0
    %337 = vmatpush.xpose.msra.mxu0 0.0
    %338 = vmatpush.xpose.msra.mxu0 0.0
    %339 = vmatpush.xpose.msra.mxu0 0.0
    %340 = vmatpush.xpose.msra.mxu0 0.0
    %341 = vmatpush.xpose.msra.mxu0 %v324
    %342 = vmatmul.f32.gmra.mxu0 %v322
    %v343 = vpop.f32.mrf.mxu0
    %v344 = vadd.f32 %v318, %v343
    %345 = vdwg.mxu0
    %v346 = vperm.slane %v101, 1
    %v347 = vmul.f32 %v310, %v346
    %v348 = vsel %vm314, %v347, 0.0
    %349 = vadd.xlane.f32.xlu0 %v348
    %v350 = vpop.xlane.xlu0 %349
    %v351 = vmul.f32 %v350, %v80
    %v352 = vadd.f32 %v344, %v351
    %v353 = vperm.slane %v101, 2
    %v354 = vmul.f32 %v310, %v353
    %v355 = vsel %vm314, %v354, 0.0
    %356 = vadd.xlane.f32.xlu0 %v355
    %v357 = vpop.xlane.xlu0 %356
    %v358 = vmul.f32 %v357, %v81
    %v359 = vadd.f32 %v352, %v358
    %v360 = vperm.slane %v101, 3
    %v361 = vmul.f32 %v310, %v360
    %v362 = vsel %vm314, %v361, 0.0
    %363 = vadd.xlane.f32.xlu0 %v362
    %v364 = vpop.xlane.xlu0 %363
    %v365 = vmul.f32 %v364, %v82
    %v366 = vadd.f32 %v359, %v365
    %v367 = vmul.f32 %v366, 0.17677669
    %v368 = vadd.f32 %v367, %v84
    %v369 = vsel %vm210, %v368, -inf
    %370 = vmax.xlane.f32.xlu0 %v369
    %v371 = vpop.xlane.xlu0 %370
    %v372 = vsub.f32 %v368, %v371
    %v373 = vmul.f32 %v372, 1.442695
    %v374 = vpow.pop %v373
    %v375 = vmul.f32 %v374, %v78
    %v376 = vsel %vm210, %v375, 0.0
    %377 = vadd.xlane.f32.xlu0 %v376
    %v378 = vpop.xlane.xlu0 %377
    %v379 = vadd.f32 %v378, 1e-16
    %v380 = vrcp.pop %v379
    %v381 = vmul.f32 %v379, %v380
    %v382 = vsub.f32 1.0, %v381
    %v383 = vmul.f32 %v380, %v382
    %v384 = vadd.f32 %v380, %v383
    %vm385 = vweird.f32 %v379
    %vm386 = vweird.f32 %v380
    %vm387 = vmor %vm385, %vm386
    %v388 = vsel %vm387, %v380, %v384
    %v389 = vand.u32 2147483647, %v379
    %vm390 = vcmp.eq.f32.partialorder %v389, 8.507059e+37
    %v391 = vand.u32 %v379, 2147483648
    %v392 = vor.u32 1.1754944e-38, %v391
    %v393 = vsel %vm390, %v392, %v388
    %v394 = vmul.f32 %v375, %v393
    %v395 = vmul.f32 %v394, %v79
    %v396 = vsel %vm210, %v395, 0.0
    %397 = vadd.xlane.f32.xlu0 %v396
    %v398 = vpop.xlane.xlu0 %397
    %v399 = vmul.f32 %v398, %v312
    %400 = vrot.lane.b32.xlu0 %v310, 64
    %v401 = vpop.permute.xlu0 %400
    %v404 = vsel %vm210, %v394, 0
    %406 = vmatpush.msra.mxu0 0.0
    %407 = vmatpush.msra.mxu0 0.0
    %408 = vmatpush.msra.mxu0 0.0
    %409 = vmatpush.msra.mxu0 0.0
    %410 = vmatpush.msra.mxu0 0.0
    %411 = vmatpush.msra.mxu0 0.0
    %412 = vmatpush.msra.mxu0 0.0
    %413 = vmatpush.msra.mxu0 0.0
    %414 = vmatpush.msra.mxu0 0.0
    %415 = vmatpush.msra.mxu0 0.0
    %416 = vmatpush.msra.mxu0 0.0
    %417 = vmatpush.msra.mxu0 0.0
    %418 = vmatpush.msra.mxu0 0.0
    %419 = vmatpush.msra.mxu0 0.0
    %420 = vmatpush.msra.mxu0 0.0
    %421 = vmatpush.msra.mxu0 %v401
    %422 = vmatmul.f32.gmra.mxu0 %v404
    %v423 = vpop.f32.mrf.mxu0
    %v424 = vadd.f32 %v399, %v423
    %425 = vdwg.mxu0
    %v426 = vmul.f32 %v394, %v80
    %v427 = vsel %vm210, %v426, 0.0
    %428 = vadd.xlane.f32.xlu0 %v427
    %v429 = vpop.xlane.xlu0 %428
    %v430 = vmul.f32 %v429, %v346
    %v431 = vadd.f32 %v424, %v430
    %v432 = vmul.f32 %v394, %v81
    %v433 = vsel %vm210, %v432, 0.0
    %434 = vadd.xlane.f32.xlu0 %v433
    %v435 = vpop.xlane.xlu0 %434
    %v436 = vmul.f32 %v435, %v353
    %v437 = vadd.f32 %v431, %v436
    %v438 = vmul.f32 %v394, %v82
    %v439 = vsel %vm210, %v438, 0.0
    %440 = vadd.xlane.f32.xlu0 %v439
    %v441 = vpop.xlane.xlu0 %440
    %v442 = vmul.f32 %v441, %v360
    %v443 = vadd.f32 %v437, %v442
    %444 = vrot.lane.b32.xlu0 %v310, 32
    %v445 = vpop.permute.xlu0 %444
    %v447 = vadd.f32 %v443, %v445
    %v448 = vmax.f32 %v447, 0.0
    %450 = vset.pattern.permute.xlu0 0
    %451 = vperm.xlu0 %450, %v103
    %v452 = vpop.permute.xlu0 %451
    %v455 = vsel %vm314, %v102, 0
    %v458 = vsel %vm314, %v448, 0
    %460 = vmatpush.xpose.msra.mxu0 0.0
    %461 = vmatpush.xpose.msra.mxu0 0.0
    %462 = vmatpush.xpose.msra.mxu0 0.0
    %463 = vmatpush.xpose.msra.mxu0 0.0
    %464 = vmatpush.xpose.msra.mxu0 0.0
    %465 = vmatpush.xpose.msra.mxu0 0.0
    %466 = vmatpush.xpose.msra.mxu0 0.0
    %467 = vmatpush.xpose.msra.mxu0 0.0
    %468 = vmatpush.xpose.msra.mxu0 0.0
    %469 = vmatpush.xpose.msra.mxu0 0.0
    %470 = vmatpush.xpose.msra.mxu0 0.0
    %471 = vmatpush.xpose.msra.mxu0 0.0
    %472 = vmatpush.xpose.msra.mxu0 0.0
    %473 = vmatpush.xpose.msra.mxu0 0.0
    %474 = vmatpush.xpose.msra.mxu0 0.0
    %475 = vmatpush.xpose.msra.mxu0 %v458
    %476 = vmatmul.f32.gmra.mxu0 %v455
    %v477 = vpop.f32.mrf.mxu0
    %v478 = vadd.f32 %v452, %v477
    %479 = vdwg.mxu0
    %v480 = vxor.u32 %v478, 2147483648
    %v481 = vmul.f32 %v480, 1.442695
    %v482 = vpow.pop %v481
    %v483 = vadd.f32 %v482, 1.0
    %v484 = vrcp.pop %v483
    %v485 = vmul.f32 %v483, %v484
    %v486 = vsub.f32 1.0, %v485
    %v487 = vmul.f32 %v484, %v486
    %v488 = vadd.f32 %v484, %v487
    %vm489 = vweird.f32 %v483
    %vm490 = vweird.f32 %v484
    %vm491 = vmor %vm489, %vm490
    %v492 = vsel %vm491, %v484, %v488
    %v493 = vand.u32 2147483647, %v483
    %vm494 = vcmp.eq.f32.partialorder %v493, 8.507059e+37
    %v495 = vand.u32 %v483, 2147483648
    %v496 = vor.u32 1.1754944e-38, %v495
    %v497 = vsel %vm494, %v496, %v492
    %v498 = vmul.f32 1.0, %v497
    %vm499 = vcmask 57344
    %500 = vst.msk [vmem:[#allocation10] sm:$0x1] %vm499, %v498
    // Predicated region
    $region34: #{tpu_custom_call.1} parent=1 // pred_check
      _
    $region35: #{tpu_custom_call.1} parent=1 // pred_check_branch
      %502 = sbr.rel (0) target = $region37
    $region36: #{tpu_custom_call.1} parent=1 // pred_region
      %504 = vsyncadd [#allocation4], 0
      %s506 = sshll.u32 [#allocation10], 4
      %s507 = int_to_ptr.vmem [resolvable:$true] %s506
      %s508 = sshll.u32 %s4, 4
      %s509 = int_to_ptr.hbm [resolvable:$true] %s508
      %511 = dma.vmem_to_hbm [thread:$0]  %s507, 16, %s509, [#allocation4]
    $region37: #{tpu_custom_call.1} parent=1 // pred_fallthru
      _
    // Predicated region
    $region38: #{tpu_custom_call.1} parent=1 // pred_check
      _
    $region39: #{tpu_custom_call.1} parent=1 // pred_check_branch
      %513 = sbr.rel (0) target = $region41
    $region40: #{tpu_custom_call.1} parent=1 // pred_region
      %515 = dma.done [#allocation4], 16
    $region41: #{tpu_custom_call.1} parent=1 // pred_fallthru
      _
    %516 = vsyncpa [#allocation3], 1
    %517 = vsyncpa [#allocation6], 1
    %518 = vsyncpa [#allocation9], 1
    %519 = vsyncpa [#allocation4], 1

</llo_original>
